<compile_context>
chip_gen: v7x
topology: tpu7x:2x2x1
jax: 0.10.0
libtpu: 0.0.40
codegen_flags: <defaults>
</compile_context>

<pallas_src>
import jax
import jax.numpy as jnp
import numpy as np
from jax.experimental import pallas as pl
from jax.experimental.pallas import tpu as pltpu

EPS = 1e-5


def _adaptive_pool_matrix(in_dim: int, out_dim: int) -> np.ndarray:
    """Exact nn.AdaptiveAvgPool2d windowing as a (out_dim, in_dim) averaging matrix."""
    m = np.zeros((out_dim, in_dim), dtype=np.float32)
    for i in range(out_dim):
        start = (i * in_dim) // out_dim
        end = -((-(i + 1) * in_dim) // out_dim)  # ceil((i+1)*in_dim/out_dim)
        m[i, start:end] = 1.0 / float(end - start)
    return m


def _general_flow_kernel(x_ref, p_ref, g_ref, b_ref, o_ref):
    # x_ref: (C, N*H*W)   p_ref: (N*H*W, N*S*S)   g_ref/b_ref: (C, 1)
    # One fused matmul does adaptive avg-pool for all channels / batch at once.
    pooled = jnp.dot(x_ref[...], p_ref[...],
                     preferred_element_type=jnp.float32)      # (C, N*S*S)

    # BatchNorm2d (training mode on a fresh module): per-channel batch stats over
    # N*S*S elements, biased variance, eps = 1e-5.  Lane reductions per channel.
    mean = jnp.mean(pooled, axis=-1, keepdims=True)           # (C, 1)
    centered = pooled - mean
    var = jnp.mean(centered * centered, axis=-1, keepdims=True)
    inv_std = jax.lax.rsqrt(var + EPS)

    y = centered * inv_std * g_ref[...] + b_ref[...]

    # ReLU, lane-dense store.
    o_ref[...] = jnp.maximum(y, 0.0)


def general_flow(x, gamma, beta, size):
    """x: (N, C, H, W) float32; gamma/beta: (C,) float32; size: output spatial dim."""
    n, c, h, w = x.shape
    s = size

    # Host-side pooling operator:
    #   P[h*W+w, i*S+j] = Ph[i, h] * Pw[j, w]      (exact adaptive-pool weights)
    #   P_big = blockdiag_N(P)  so the batch dim rides along the contraction.
    ph = _adaptive_pool_matrix(h, s)                           # (S, H)
    pw = _adaptive_pool_matrix(w, s)                           # (S, W)
    p = np.kron(ph, pw).T                                      # (H*W, S*S)
    p_big = jnp.asarray(np.kron(np.eye(n, dtype=np.float32), p))  # (N*H*W, N*S*S)

    # Channel-major 2D input layout: row c holds [n, h, w] flattened.
    x2d = jnp.transpose(x, (1, 0, 2, 3)).reshape(c, n * h * w)   # (C, N*H*W)
    g2d = gamma.reshape(c, 1)
    b2d = beta.reshape(c, 1)

    out2d = pl.pallas_call(
        _general_flow_kernel,
        out_shape=jax.ShapeDtypeStruct((c, n * s * s), jnp.float32),
        grid=(1,),
        in_specs=[
            pl.BlockSpec((c, n * h * w), lambda i: (0, 0)),
            pl.BlockSpec((n * h * w, n * s * s), lambda i: (0, 0)),
            pl.BlockSpec((c, 1), lambda i: (0, 0)),
            pl.BlockSpec((c, 1), lambda i: (0, 0)),
        ],
        out_specs=pl.BlockSpec((c, n * s * s), lambda i: (0, 0)),
        compiler_params=pltpu.CompilerParams(
            dimension_semantics=("arbitrary",),
        ),
    )(x2d, p_big, g2d, b2d)

    # Back to NCHW in the wrapper (pure layout plumbing outside the kernel).
    return jnp.transpose(out2d.reshape(c, n, s, s), (1, 0, 2, 3))


def general_flow_reference(x, gamma, beta, size):
    """Pure-JAX reference mirroring PyTorch semantics (pool -> train-mode BN -> ReLU)."""
    n, c, h, w = x.shape
    ph = jnp.asarray(_adaptive_pool_matrix(h, size))           # (S, H)
    pw = jnp.asarray(_adaptive_pool_matrix(w, size))           # (S, W)
    pooled = jnp.einsum("sh,nchw,tw->ncst", ph, x, pw)          # (N, C, S, S)
    mean = jnp.mean(pooled, axis=(0, 2, 3), keepdims=True)
    var = jnp.mean((pooled - mean) ** 2, axis=(0, 2, 3), keepdims=True)
    y = (pooled - mean) / jnp.sqrt(var + EPS)
    y = y * gamma[None, :, None, None] + beta[None, :, None, None]
    return jnp.maximum(y, 0.0)


if __name__ == "__main__":
    # Small shapes consistent with the module: out_ch = C = 4, size = 6.
    N, C, H, W = 2, 4, 16, 16
    SIZE = 6

    key = jax.random.PRNGKey(0)
    kx, _ = jax.random.split(key)
    x = jax.random.normal(kx, (N, C, H, W), dtype=jnp.float32)

    # Deterministic BatchNorm affine parameters (synthetic, not a checkpoint).
    gamma = 1.0 + 0.1 * jnp.arange(C, dtype=jnp.float32)
    beta = 0.05 * jnp.arange(C, dtype=jnp.float32) - 0.1

    out = general_flow(x, gamma, beta, SIZE)
    out = jax.block_until_ready(out)

    ref = general_flow_reference(x, gamma, beta, SIZE)
    np.testing.assert_allclose(np.asarray(out), np.asarray(ref), rtol=1e-5, atol=1e-5)

    print("KERNEL_OK")
</pallas_src>

<mosaic_0001>
module attributes {stable_mosaic.version = 11 : i64} {
  func.func @_general_flow_kernel(%arg0: i32, %arg1: memref<4x512xf32, #tpu.memory_space<vmem>>, %arg2: memref<512x72xf32, #tpu.memory_space<vmem>>, %arg3: memref<4x1xf32, #tpu.memory_space<vmem>>, %arg4: memref<4x1xf32, #tpu.memory_space<vmem>>, %arg5: memref<4x72xf32, #tpu.memory_space<vmem>>) attributes {dimension_semantics = [#tpu.dimension_semantics<arbitrary>], iteration_bounds = array<i64: 1>, scalar_prefetch = 0 : i64, scratch_operands = 0 : i64, tpu.core_type = #tpu.core_type<tc>, window_params = [{pipeline_mode = #tpu.pipeline_mode<synchronous>, transform_indices = @transform_0, window_bounds = array<i64: 4, 512>}, {pipeline_mode = #tpu.pipeline_mode<synchronous>, transform_indices = @transform_1, window_bounds = array<i64: 512, 72>}, {pipeline_mode = #tpu.pipeline_mode<synchronous>, transform_indices = @transform_2, window_bounds = array<i64: 4, 1>}, {pipeline_mode = #tpu.pipeline_mode<synchronous>, transform_indices = @transform_3, window_bounds = array<i64: 4, 1>}, {pipeline_mode = #tpu.pipeline_mode<synchronous>, transform_indices = @transform_4, window_bounds = array<i64: 4, 72>}]} {
    %c0 = arith.constant 0 : index
    %c0_0 = arith.constant 0 : index
    %0 = vector.load %arg1[%c0, %c0_0] : memref<4x512xf32, #tpu.memory_space<vmem>>, vector<4x512xf32>
    %c0_1 = arith.constant 0 : index
    %c0_2 = arith.constant 0 : index
    %1 = vector.load %arg2[%c0_1, %c0_2] : memref<512x72xf32, #tpu.memory_space<vmem>>, vector<512x72xf32>
    %cst = arith.constant dense<0.000000e+00> : vector<4x72xf32>
    %2 = tpu.matmul %0, %1, %cst {dimension_numbers = #tpu.dot_dimension_numbers<[1], [0], [0], [1], [0, 0, 1, 1], [], []>} : vector<4x512xf32>, vector<512x72xf32>, vector<4x72xf32> -> vector<4x72xf32>
    %cst_3 = arith.constant dense<0.000000e+00> : vector<4xf32>
    %3 = vector.multi_reduction <add>, %2, %cst_3 [1] : vector<4x72xf32> to vector<4xf32>
    %4 = vector.shape_cast %3 : vector<4xf32> to vector<4x1xf32>
    %cst_4 = arith.constant 7.200000e+01 : f32
    %5 = vector.broadcast %cst_4 : f32 to vector<4x1xf32>
    %6 = arith.divf %4, %5 : vector<4x1xf32>
    %7 = vector.broadcast %6 : vector<4x1xf32> to vector<4x72xf32>
    %8 = arith.subf %2, %7 : vector<4x72xf32>
    %9 = arith.mulf %8, %8 : vector<4x72xf32>
    %cst_5 = arith.constant dense<0.000000e+00> : vector<4xf32>
    %10 = vector.multi_reduction <add>, %9, %cst_5 [1] : vector<4x72xf32> to vector<4xf32>
    %11 = vector.shape_cast %10 : vector<4xf32> to vector<4x1xf32>
    %cst_6 = arith.constant 7.200000e+01 : f32
    %12 = vector.broadcast %cst_6 : f32 to vector<4x1xf32>
    %13 = arith.divf %11, %12 : vector<4x1xf32>
    %cst_7 = arith.constant 9.99999974E-6 : f32
    %14 = vector.broadcast %cst_7 : f32 to vector<4x1xf32>
    %15 = arith.addf %13, %14 : vector<4x1xf32>
    %16 = math.rsqrt %15 : vector<4x1xf32>
    %17 = vector.broadcast %16 : vector<4x1xf32> to vector<4x72xf32>
    %18 = arith.mulf %8, %17 : vector<4x72xf32>
    %c0_8 = arith.constant 0 : index
    %c0_9 = arith.constant 0 : index
    %19 = vector.load %arg3[%c0_8, %c0_9] : memref<4x1xf32, #tpu.memory_space<vmem>>, vector<4x1xf32>
    %20 = vector.broadcast %19 : vector<4x1xf32> to vector<4x72xf32>
    %21 = arith.mulf %18, %20 : vector<4x72xf32>
    %c0_10 = arith.constant 0 : index
    %c0_11 = arith.constant 0 : index
    %22 = vector.load %arg4[%c0_10, %c0_11] : memref<4x1xf32, #tpu.memory_space<vmem>>, vector<4x1xf32>
    %23 = vector.broadcast %22 : vector<4x1xf32> to vector<4x72xf32>
    %24 = arith.addf %21, %23 : vector<4x72xf32>
    %cst_12 = arith.constant 0.000000e+00 : f32
    %25 = vector.broadcast %cst_12 : f32 to vector<4x72xf32>
    %26 = arith.maximumf %24, %25 : vector<4x72xf32>
    %c0_13 = arith.constant 0 : index
    %c0_14 = arith.constant 0 : index
    %27 = vector.load %arg5[%c0_13, %c0_14] : memref<4x72xf32, #tpu.memory_space<vmem>>, vector<4x72xf32>
    tpu.vector_store %arg5[%c0_13, %c0_14], %26 {strides = array<i32>} : memref<4x72xf32, #tpu.memory_space<vmem>>, vector<4x72xf32>,
    return
  }
  func.func @transform_0(%arg0: i32) -> (i32, i32) {
    %c0_i32 = arith.constant 0 : i32
    %c0_i32_0 = arith.constant 0 : i32
    %c0_i32_1 = arith.constant 0 : i32
    return %c0_i32, %c0_i32_0 : i32, i32
  }
  func.func @transform_1(%arg0: i32) -> (i32, i32) {
    %c0_i32 = arith.constant 0 : i32
    %c0_i32_0 = arith.constant 0 : i32
    %c0_i32_1 = arith.constant 0 : i32
    return %c0_i32, %c0_i32_0 : i32, i32
  }
  func.func @transform_2(%arg0: i32) -> (i32, i32) {
    %c0_i32 = arith.constant 0 : i32
    %c0_i32_0 = arith.constant 0 : i32
    %c0_i32_1 = arith.constant 0 : i32
    return %c0_i32, %c0_i32_0 : i32, i32
  }
  func.func @transform_3(%arg0: i32) -> (i32, i32) {
    %c0_i32 = arith.constant 0 : i32
    %c0_i32_0 = arith.constant 0 : i32
    %c0_i32_1 = arith.constant 0 : i32
    return %c0_i32, %c0_i32_0 : i32, i32
  }
  func.func @transform_4(%arg0: i32) -> (i32, i32) {
    %c0_i32 = arith.constant 0 : i32
    %c0_i32_0 = arith.constant 0 : i32
    %c0_i32_1 = arith.constant 0 : i32
    return %c0_i32, %c0_i32_0 : i32, i32
  }
}

</mosaic_0001>

<llo_original>
// kernel: tpu_custom_call.1
$region0: #{tpu_custom_call.1}
  #allocation0 [shape = 'u32[]', space=smem, size = 0x4, offset = 0x4, fixed_abs, tag = 'smem constant byte address 0x4 - core index']
  #allocation1 [shape = 'u32[144,128]{1,0:T(1,128)}', space=vmem, size = 0x12000, scoped, tag = 'internal scratch']
  %s0 = inlined_call_operand.vmem [shape: f32[4,512], index: 0, kind: input, shape index: {}]
  %s1 = inlined_call_operand.vmem [shape: f32[512,72], index: 1, kind: input, shape index: {}]
  %s2 = inlined_call_operand.vmem [shape: f32[4,1], index: 2, kind: input, shape index: {}]
  %s3 = inlined_call_operand.vmem [shape: f32[4,1], index: 3, kind: input, shape index: {}]
  %s4 = inlined_call_operand.hbm [shape: f32[4,72], index: 4, kind: output, shape index: {}]
  %s5 = sld [smem:[#allocation0]]
  $region26: #{tpu_custom_call.1} parent=0
    _
  %s7 = ssub.s32 1, %s5
  %s8 = scalar_select 0, %s7, %s5
  $region1: #{tpu_custom_call.1} parent=0
    #allocation2 [shape = 'u8[2048]{0}', space=vmem, size = 0x800, scoped, tag = 'output window, operand 0, single buffered']
    #allocation3 [shape = 's32[1]{0}', space=sflag, size = 0x4, scoped, tag = 'scoped memory for tpu_custom_call.1']
    %9 = vsyncpa [#allocation3], 0
    // Predicated region
    $region2: #{tpu_custom_call.1} parent=1 // pred_check
      _
    $region3: #{tpu_custom_call.1} parent=1 // pred_check_branch
      %11 = sbr.rel (0) target = $region5
    $region4: #{tpu_custom_call.1} parent=1 // pred_region
      _
    $region5: #{tpu_custom_call.1} parent=1 // pred_fallthru
      _
    // Predicated region
    $region6: #{tpu_custom_call.1} parent=1 // pred_check
      _
    $region7: #{tpu_custom_call.1} parent=1 // pred_check_branch
      %13 = sbr.rel (0) target = $region9
    $region8: #{tpu_custom_call.1} parent=1 // pred_region
      _
    $region9: #{tpu_custom_call.1} parent=1 // pred_fallthru
      _
    // Predicated region
    $region10: #{tpu_custom_call.1} parent=1 // pred_check
      _
    $region11: #{tpu_custom_call.1} parent=1 // pred_check_branch
      %15 = sbr.rel (0) target = $region13
    $region12: #{tpu_custom_call.1} parent=1 // pred_region
      _
    $region13: #{tpu_custom_call.1} parent=1 // pred_fallthru
      _
    // Predicated region
    $region14: #{tpu_custom_call.1} parent=1 // pred_check
      _
    $region15: #{tpu_custom_call.1} parent=1 // pred_check_branch
      %17 = sbr.rel (0) target = $region17
    $region16: #{tpu_custom_call.1} parent=1 // pred_region
      _
    $region17: #{tpu_custom_call.1} parent=1 // pred_fallthru
      _
    %v18 = vld [vmem:[%s0] sm:$0xff]
    %v19 = vld [vmem:[%s0 + $0x8] sm:$0xff]
    %v20 = vld [vmem:[%s1] sm:$0xff]
    %v21 = vld [vmem:[%s1 + $0x8] sm:$0xff]
    %v22 = vld [vmem:[%s1 + $0x10] sm:$0xff]
    %v23 = vld [vmem:[%s1 + $0x18] sm:$0xff]
    %v24 = vld [vmem:[%s1 + $0x20] sm:$0xff]
    %v25 = vld [vmem:[%s1 + $0x28] sm:$0xff]
    %v26 = vld [vmem:[%s1 + $0x30] sm:$0xff]
    %v27 = vld [vmem:[%s1 + $0x38] sm:$0xff]
    %v28 = vld [vmem:[%s1 + $0x40] sm:$0xff]
    %v29 = vld [vmem:[%s1 + $0x48] sm:$0xff]
    %v30 = vld [vmem:[%s1 + $0x50] sm:$0xff]
    %v31 = vld [vmem:[%s1 + $0x58] sm:$0xff]
    %v32 = vld [vmem:[%s1 + $0x60] sm:$0xff]
    %v33 = vld [vmem:[%s1 + $0x68] sm:$0xff]
    %v34 = vld [vmem:[%s1 + $0x70] sm:$0xff]
    %v35 = vld [vmem:[%s1 + $0x78] sm:$0xff]
    %v36 = vld [vmem:[%s1 + $0x80] sm:$0xff]
    %v37 = vld [vmem:[%s1 + $0x88] sm:$0xff]
    %v38 = vld [vmem:[%s1 + $0x90] sm:$0xff]
    %v39 = vld [vmem:[%s1 + $0x98] sm:$0xff]
    %v40 = vld [vmem:[%s1 + $0xa0] sm:$0xff]
    %v41 = vld [vmem:[%s1 + $0xa8] sm:$0xff]
    %v42 = vld [vmem:[%s1 + $0xb0] sm:$0xff]
    %v43 = vld [vmem:[%s1 + $0xb8] sm:$0xff]
    %v44 = vld [vmem:[%s1 + $0xc0] sm:$0xff]
    %v45 = vld [vmem:[%s1 + $0xc8] sm:$0xff]
    %v46 = vld [vmem:[%s1 + $0xd0] sm:$0xff]
    %v47 = vld [vmem:[%s1 + $0xd8] sm:$0xff]
    %v48 = vld [vmem:[%s1 + $0xe0] sm:$0xff]
    %v49 = vld [vmem:[%s1 + $0xe8] sm:$0xff]
    %v50 = vld [vmem:[%s1 + $0xf0] sm:$0xff]
    %v51 = vld [vmem:[%s1 + $0xf8] sm:$0xff]
    %v52 = vld [vmem:[%s1 + $0x100] sm:$0xff]
    %v53 = vld [vmem:[%s1 + $0x108] sm:$0xff]
    %v54 = vld [vmem:[%s1 + $0x110] sm:$0xff]
    %v55 = vld [vmem:[%s1 + $0x118] sm:$0xff]
    %v56 = vld [vmem:[%s1 + $0x120] sm:$0xff]
    %v57 = vld [vmem:[%s1 + $0x128] sm:$0xff]
    %v58 = vld [vmem:[%s1 + $0x130] sm:$0xff]
    %v59 = vld [vmem:[%s1 + $0x138] sm:$0xff]
    %v60 = vld [vmem:[%s1 + $0x140] sm:$0xff]
    %v61 = vld [vmem:[%s1 + $0x148] sm:$0xff]
    %v62 = vld [vmem:[%s1 + $0x150] sm:$0xff]
    %v63 = vld [vmem:[%s1 + $0x158] sm:$0xff]
    %v64 = vld [vmem:[%s1 + $0x160] sm:$0xff]
    %v65 = vld [vmem:[%s1 + $0x168] sm:$0xff]
    %v66 = vld [vmem:[%s1 + $0x170] sm:$0xff]
    %v67 = vld [vmem:[%s1 + $0x178] sm:$0xff]
    %v68 = vld [vmem:[%s1 + $0x180] sm:$0xff]
    %v69 = vld [vmem:[%s1 + $0x188] sm:$0xff]
    %v70 = vld [vmem:[%s1 + $0x190] sm:$0xff]
    %v71 = vld [vmem:[%s1 + $0x198] sm:$0xff]
    %v72 = vld [vmem:[%s1 + $0x1a0] sm:$0xff]
    %v73 = vld [vmem:[%s1 + $0x1a8] sm:$0xff]
    %v74 = vld [vmem:[%s1 + $0x1b0] sm:$0xff]
    %v75 = vld [vmem:[%s1 + $0x1b8] sm:$0xff]
    %v76 = vld [vmem:[%s1 + $0x1c0] sm:$0xff]
    %v77 = vld [vmem:[%s1 + $0x1c8] sm:$0xff]
    %v78 = vld [vmem:[%s1 + $0x1d0] sm:$0xff]
    %v79 = vld [vmem:[%s1 + $0x1d8] sm:$0xff]
    %v80 = vld [vmem:[%s1 + $0x1e0] sm:$0xff]
    %v81 = vld [vmem:[%s1 + $0x1e8] sm:$0xff]
    %v82 = vld [vmem:[%s1 + $0x1f0] sm:$0xff]
    %v83 = vld [vmem:[%s1 + $0x1f8] sm:$0xff]
    %v86 = vcombine.high %v18, %v18
    %v87 = vcombine.high %v19, %v19
    %90 = vmatprep.subr.mxu0 0.0
    %91 = vmatpush1.msra.mxu0 %v20
    %92 = vmatprep.subr.mxu0 0.0
    %93 = vmatpush1.msra.mxu0 %v21
    %94 = vmatprep.subr.mxu0 0.0
    %95 = vmatpush1.msra.mxu0 %v22
    %96 = vmatprep.subr.mxu0 0.0
    %97 = vmatpush1.msra.mxu0 %v23
    %98 = vmatprep.subr.mxu0 0.0
    %99 = vmatpush1.msra.mxu0 %v24
    %100 = vmatprep.subr.mxu0 0.0
    %101 = vmatpush1.msra.mxu0 %v25
    %102 = vmatprep.subr.mxu0 0.0
    %103 = vmatpush1.msra.mxu0 %v26
    %104 = vmatprep.subr.mxu0 0.0
    %105 = vmatpush1.msra.mxu0 %v27
    %106 = vmatprep.subr.mxu0 0.0
    %107 = vmatpush1.msra.mxu0 %v28
    %108 = vmatprep.subr.mxu0 0.0
    %109 = vmatpush1.msra.mxu0 %v29
    %110 = vmatprep.subr.mxu0 0.0
    %111 = vmatpush1.msra.mxu0 %v30
    %112 = vmatprep.subr.mxu0 0.0
    %113 = vmatpush1.msra.mxu0 %v31
    %114 = vmatprep.subr.mxu0 0.0
    %115 = vmatpush1.msra.mxu0 %v32
    %116 = vmatprep.subr.mxu0 0.0
    %117 = vmatpush1.msra.mxu0 %v33
    %118 = vmatprep.subr.mxu0 0.0
    %119 = vmatpush1.msra.mxu0 %v34
    %120 = vmatprep.subr.mxu0 0.0
    %121 = vmatpush1.msra.mxu0 %v35
    %122 = vmatprep.subr.mxu0 0.0
    %123 = vmatpush1.msra.mxu0 %v36
    %124 = vmatprep.subr.mxu0 0.0
    %125 = vmatpush1.msra.mxu0 %v37
    %126 = vmatprep.subr.mxu0 0.0
    %127 = vmatpush1.msra.mxu0 %v38
    %128 = vmatprep.subr.mxu0 0.0
    %129 = vmatpush1.msra.mxu0 %v39
    %130 = vmatprep.subr.mxu0 0.0
    %131 = vmatpush1.msra.mxu0 %v40
    %132 = vmatprep.subr.mxu0 0.0
    %133 = vmatpush1.msra.mxu0 %v41
    %134 = vmatprep.subr.mxu0 0.0
    %135 = vmatpush1.msra.mxu0 %v42
    %136 = vmatprep.subr.mxu0 0.0
    %137 = vmatpush1.msra.mxu0 %v43
    %138 = vmatprep.subr.mxu0 0.0
    %139 = vmatpush1.msra.mxu0 %v44
    %140 = vmatprep.subr.mxu0 0.0
    %141 = vmatpush1.msra.mxu0 %v45
    %142 = vmatprep.subr.mxu0 0.0
    %143 = vmatpush1.msra.mxu0 %v46
    %144 = vmatprep.subr.mxu0 0.0
    %145 = vmatpush1.msra.mxu0 %v47
    %146 = vmatprep.subr.mxu0 0.0
    %147 = vmatpush1.msra.mxu0 %v48
    %148 = vmatprep.subr.mxu0 0.0
    %149 = vmatpush1.msra.mxu0 %v49
    %150 = vmatprep.subr.mxu0 0.0
    %151 = vmatpush1.msra.mxu0 %v50
    %152 = vmatprep.subr.mxu0 0.0
    %153 = vmatpush1.msra.mxu0 %v51
    %154 = vmatprep.mubr.f32.mxu0 %v86
    %155 = vmatmul.mubr.f32.gmra.mrb[0].mxu0 %v18
    %v156 = vpop.f32.mrb[0].mxu0
    %v157 = vadd.f32 0.0, %v156
    %v158 = vpop.f32.mrb[0].mxu0
    %159 = vdwg.mxu0
    %160 = vmatprep.subr.mxu0 0.0
    %161 = vmatpush1.msra.mxu0 %v52
    %162 = vmatprep.subr.mxu0 0.0
    %163 = vmatpush1.msra.mxu0 %v53
    %164 = vmatprep.subr.mxu0 0.0
    %165 = vmatpush1.msra.mxu0 %v54
    %166 = vmatprep.subr.mxu0 0.0
    %167 = vmatpush1.msra.mxu0 %v55
    %168 = vmatprep.subr.mxu0 0.0
    %169 = vmatpush1.msra.mxu0 %v56
    %170 = vmatprep.subr.mxu0 0.0
    %171 = vmatpush1.msra.mxu0 %v57
    %172 = vmatprep.subr.mxu0 0.0
    %173 = vmatpush1.msra.mxu0 %v58
    %174 = vmatprep.subr.mxu0 0.0
    %175 = vmatpush1.msra.mxu0 %v59
    %176 = vmatprep.subr.mxu0 0.0
    %177 = vmatpush1.msra.mxu0 %v60
    %178 = vmatprep.subr.mxu0 0.0
    %179 = vmatpush1.msra.mxu0 %v61
    %180 = vmatprep.subr.mxu0 0.0
    %181 = vmatpush1.msra.mxu0 %v62
    %182 = vmatprep.subr.mxu0 0.0
    %183 = vmatpush1.msra.mxu0 %v63
    %184 = vmatprep.subr.mxu0 0.0
    %185 = vmatpush1.msra.mxu0 %v64
    %186 = vmatprep.subr.mxu0 0.0
    %187 = vmatpush1.msra.mxu0 %v65
    %188 = vmatprep.subr.mxu0 0.0
    %189 = vmatpush1.msra.mxu0 %v66
    %190 = vmatprep.subr.mxu0 0.0
    %191 = vmatpush1.msra.mxu0 %v67
    %192 = vmatprep.subr.mxu0 0.0
    %193 = vmatpush1.msra.mxu0 %v68
    %194 = vmatprep.subr.mxu0 0.0
    %195 = vmatpush1.msra.mxu0 %v69
    %196 = vmatprep.subr.mxu0 0.0
    %197 = vmatpush1.msra.mxu0 %v70
    %198 = vmatprep.subr.mxu0 0.0
    %199 = vmatpush1.msra.mxu0 %v71
    %200 = vmatprep.subr.mxu0 0.0
    %201 = vmatpush1.msra.mxu0 %v72
    %202 = vmatprep.subr.mxu0 0.0
    %203 = vmatpush1.msra.mxu0 %v73
    %204 = vmatprep.subr.mxu0 0.0
    %205 = vmatpush1.msra.mxu0 %v74
    %206 = vmatprep.subr.mxu0 0.0
    %207 = vmatpush1.msra.mxu0 %v75
    %208 = vmatprep.subr.mxu0 0.0
    %209 = vmatpush1.msra.mxu0 %v76
    %210 = vmatprep.subr.mxu0 0.0
    %211 = vmatpush1.msra.mxu0 %v77
    %212 = vmatprep.subr.mxu0 0.0
    %213 = vmatpush1.msra.mxu0 %v78
    %214 = vmatprep.subr.mxu0 0.0
    %215 = vmatpush1.msra.mxu0 %v79
    %216 = vmatprep.subr.mxu0 0.0
    %217 = vmatpush1.msra.mxu0 %v80
    %218 = vmatprep.subr.mxu0 0.0
    %219 = vmatpush1.msra.mxu0 %v81
    %220 = vmatprep.subr.mxu0 0.0
    %221 = vmatpush1.msra.mxu0 %v82
    %222 = vmatprep.subr.mxu0 0.0
    %223 = vmatpush1.msra.mxu0 %v83
    %224 = vmatprep.mubr.f32.mxu0 %v87
    %225 = vmatmul.mubr.f32.gmra.mrb[0].mxu0 %v19
    %v226 = vpop.f32.mrb[0].mxu0
    %v227 = vadd.f32 %v157, %v226
    %v228 = vpop.f32.mrb[0].mxu0
    %229 = vdwg.mxu0
    %vm230 = vcmask 584704
    %v231 = vsel %vm230, %v227, 0.0
    %232 = vadd.xlane.f32.xlu0 %v231
    %v233 = vpop.xlane.xlu0 %232
    %v234 = vrcp.pop 72.0
    %v235 = vmul.f32 %v233, %v234
    %v236 = vsub.f32 %v227, %v235
    %v237 = vmul.f32 %v236, %v236
    %v238 = vsel %vm230, %v237, 0.0
    %239 = vadd.xlane.f32.xlu0 %v238
    %v240 = vpop.xlane.xlu0 %239
    %v241 = vmul.f32 %v240, %v234
    %v242 = vadd.f32 %v241, 1e-05
    %v243 = vrsqrt.pop %v242
    %v244 = vmul.f32 %v236, %v243
    %v245 = vld [vmem:[%s2] sm:$0xf]
    %247 = vset.pattern.permute.xlu0 0
    %248 = vperm.xlu0 %247, %v245
    %v249 = vpop.permute.xlu0 %248
    %v251 = vmul.f32 %v244, %v249
    %v252 = vld [vmem:[%s3] sm:$0xf]
    %254 = vset.pattern.permute.xlu0 0
    %255 = vperm.xlu0 %254, %v252
    %v256 = vpop.permute.xlu0 %255
    %v258 = vadd.f32 %v251, %v256
    %v259 = vmax.f32 %v258, 0.0
    %260 = vst.msk [vmem:[#allocation2] sm:$0xf] %vm230, %v259
    // Predicated region
    $region18: #{tpu_custom_call.1} parent=1 // pred_check
      _
    $region19: #{tpu_custom_call.1} parent=1 // pred_check_branch
      %262 = sbr.rel (0) target = $region21
    $region20: #{tpu_custom_call.1} parent=1 // pred_region
      %s264 = ssub.s32 64, 64
      %265 = vsyncadd [#allocation3], %s264
      %s267 = sshll.u32 [#allocation2], 4
      %s268 = int_to_ptr.vmem [resolvable:$true] %s267
      %270 = dma.vmem_to_hbm [thread:$0]  %s268, 64, %s4, [#allocation3]
    $region21: #{tpu_custom_call.1} parent=1 // pred_fallthru
      _
    // Predicated region
    $region22: #{tpu_custom_call.1} parent=1 // pred_check
      _
    $region23: #{tpu_custom_call.1} parent=1 // pred_check_branch
      %272 = sbr.rel (0) target = $region25
    $region24: #{tpu_custom_call.1} parent=1 // pred_region
      %273 = dma.done [#allocation3], 64
    $region25: #{tpu_custom_call.1} parent=1 // pred_fallthru
      _
    %274 = vsyncpa [#allocation3], 1

</llo_original>
